<compile_context>
chip_gen: v7x
topology: tpu7x:2x2x1
jax: 0.10.0
libtpu: 0.0.40
codegen_flags: <defaults>
</compile_context>

<pallas_src>
import jax
import jax.numpy as jnp
from jax.experimental import pallas as pl
from jax.experimental.pallas import tpu as pltpu

D_IN = 64        # logical input feature dim
D_PAD = 128      # lane-padded input dim fed to the kernel
H = 256          # hidden dim
OUT = 128        # embedding dim (outdim=128 default in SiameseNet)
TM_TARGET = 512  # batch tile rows (sized for v7x's 64 MiB VMEM; fine on v5e/v6e)


def _round_up(n, m):
    return ((n + m - 1) // m) * m


def _siamese_kernel(x1_ref, x2_ref,
                    w1_ref, b1_ref, w2_ref, b2_ref, w3_ref, b3_ref,
                    o1_ref, o2_ref):
    """Shared 3-layer MLP tower applied to a batch tile of x1 and of x2.

    All matmuls are bf16 x bf16 -> f32 (MXU-native); biases are f32 and are
    added to the f32 accumulator via implicit (1,H) broadcast (no explicit
    broadcast_to in any loop).  The intermediate is cast back to bf16 before
    the next matmul to keep MXU throughput and VMEM footprint low.
    """
    w1 = w1_ref[...]
    b1 = b1_ref[...]
    w2 = w2_ref[...]
    b2 = b2_ref[...]
    w3 = w3_ref[...]
    b3 = b3_ref[...]

    def tower(x):
        h1 = jnp.dot(x, w1, preferred_element_type=jnp.float32) + b1
        h1 = jnp.maximum(h1, 0.0).astype(jnp.bfloat16)
        h2 = jnp.dot(h1, w2, preferred_element_type=jnp.float32) + b2
        h2 = jnp.maximum(h2, 0.0).astype(jnp.bfloat16)
        return jnp.dot(h2, w3, preferred_element_type=jnp.float32) + b3

    o1_ref[...] = tower(x1_ref[...]).astype(o1_ref.dtype)
    o2_ref[...] = tower(x2_ref[...]).astype(o2_ref.dtype)


def init_params(key):
    """Deterministic f32 parameter init, PyTorch Linear shapes transposed to (in, out)."""
    k1, k2, k3 = jax.random.split(key, 3)
    w1 = jax.random.normal(k1, (D_IN, H), jnp.float32) * (2.0 / D_IN) ** 0.5
    b1 = jnp.zeros((1, H), jnp.float32)
    w2 = jax.random.normal(k2, (H, H), jnp.float32) * (2.0 / H) ** 0.5
    b2 = jnp.zeros((1, H), jnp.float32)
    w3 = jax.random.normal(k3, (H, OUT), jnp.float32) * (2.0 / H) ** 0.5
    b3 = jnp.zeros((1, OUT), jnp.float32)
    return (w1, b1, w2, b2, w3, b3)


def prepare_params(params):
    """Pad W1 rows D_IN->D_PAD with zeros and cast weights to bf16 (biases stay f32)."""
    w1, b1, w2, b2, w3, b3 = params
    w1p = jnp.zeros((D_PAD, H), jnp.float32).at[:D_IN, :].set(w1)
    return (w1p.astype(jnp.bfloat16), b1,
            w2.astype(jnp.bfloat16), b2,
            w3.astype(jnp.bfloat16), b3)


def siamese_forward(x1, x2, kparams):
    """SiameseNet.forward: one pallas_call, two inputs / two outputs, shared weights."""
    w1p, b1, w2, b2, w3, b3 = kparams
    n = x1.shape[0]

    tm = min(TM_TARGET, _round_up(n, 8))
    n_pad = _round_up(n, tm)

    def prep(x):
        x = x.astype(jnp.bfloat16)
        return jnp.pad(x, ((0, n_pad - n), (0, D_PAD - x.shape[1])))

    x1p = prep(x1)
    x2p = prep(x2)

    row_spec = pl.BlockSpec((tm, D_PAD), lambda i: (i, 0))
    out_spec = pl.BlockSpec((tm, OUT), lambda i: (i, 0))
    const = lambda shape: pl.BlockSpec(shape, lambda i: (0, 0))  # resident weights

    # Two towers, each 2*N*(K*N) flops per layer.
    flops = 4 * n_pad * (D_PAD * H + H * H + H * OUT)
    bytes_accessed = (
        2 * n_pad * D_PAD * 2            # x1 + x2 (bf16)
        + 2 * n_pad * OUT * 4            # two f32 outputs
        + 2 * (D_PAD * H + H * H + H * OUT)  # bf16 weights
        + 4 * (H + H + OUT)              # f32 biases
    )

    o1, o2 = pl.pallas_call(
        _siamese_kernel,
        out_shape=(jax.ShapeDtypeStruct((n_pad, OUT), jnp.float32),
                   jax.ShapeDtypeStruct((n_pad, OUT), jnp.float32)),
        grid=(n_pad // tm,),
        in_specs=[
            row_spec, row_spec,
            const((D_PAD, H)), const((1, H)),
            const((H, H)), const((1, H)),
            const((H, OUT)), const((1, OUT)),
        ],
        out_specs=(out_spec, out_spec),
        compiler_params=pltpu.CompilerParams(
            dimension_semantics=("parallel",)),
        cost_estimate=pl.CostEstimate(
            flops=flops, transcendentals=0, bytes_accessed=bytes_accessed),
    )(x1p, x2p, w1p, b1, w2, b2, w3, b3)

    return o1[:n], o2[:n]


if __name__ == "__main__":
    key = jax.random.PRNGKey(0)
    kp, kx1, kx2 = jax.random.split(key, 3)
    params = init_params(kp)
    kparams = prepare_params(params)

    batch = 2
    x1 = jax.random.normal(kx1, (batch, D_IN), jnp.float32)
    x2 = jax.random.normal(kx2, (batch, D_IN), jnp.float32)

    out1, out2 = jax.jit(siamese_forward)(x1, x2, kparams)
    jax.block_until_ready((out1, out2))

    # sanity: same shared tower -> plain-JAX f32 reference must match
    # (loose tolerance because the kernel runs bf16 matmuls with f32 accumulation)
    def ref_tower(x):
        w1, b1, w2, b2, w3, b3 = params
        h1 = jnp.maximum(x @ w1 + b1, 0.0)
        h2 = jnp.maximum(h1 @ w2 + b2, 0.0)
        return h2 @ w3 + b3

    assert out1.shape == (batch, OUT) and out2.shape == (batch, OUT)
    assert jnp.allclose(out1, ref_tower(x1), atol=5e-2, rtol=5e-2)
    assert jnp.allclose(out2, ref_tower(x2), atol=5e-2, rtol=5e-2)

    print("KERNEL_OK")
</pallas_src>

<mosaic_0001>
module attributes {stable_mosaic.version = 11 : i64} {
  func.func @_siamese_kernel(%arg0: i32, %arg1: memref<8x128xbf16, #tpu.memory_space<vmem>>, %arg2: memref<8x128xbf16, #tpu.memory_space<vmem>>, %arg3: memref<128x256xbf16, #tpu.memory_space<vmem>>, %arg4: memref<1x256xf32, #tpu.memory_space<vmem>>, %arg5: memref<256x256xbf16, #tpu.memory_space<vmem>>, %arg6: memref<1x256xf32, #tpu.memory_space<vmem>>, %arg7: memref<256x128xbf16, #tpu.memory_space<vmem>>, %arg8: memref<1x128xf32, #tpu.memory_space<vmem>>, %arg9: memref<8x128xf32, #tpu.memory_space<vmem>>, %arg10: memref<8x128xf32, #tpu.memory_space<vmem>>) attributes {dimension_semantics = [#tpu.dimension_semantics<parallel>], iteration_bounds = array<i64: 1>, scalar_prefetch = 0 : i64, scratch_operands = 0 : i64, tpu.core_type = #tpu.core_type<tc>, window_params = [{transform_indices = @transform_0, window_bounds = array<i64: 8, 128>}, {transform_indices = @transform_1, window_bounds = array<i64: 8, 128>}, {pipeline_mode = #tpu.pipeline_mode<synchronous>, transform_indices = @transform_2, window_bounds = array<i64: 128, 256>}, {pipeline_mode = #tpu.pipeline_mode<synchronous>, transform_indices = @transform_3, window_bounds = array<i64: 1, 256>}, {pipeline_mode = #tpu.pipeline_mode<synchronous>, transform_indices = @transform_4, window_bounds = array<i64: 256, 256>}, {pipeline_mode = #tpu.pipeline_mode<synchronous>, transform_indices = @transform_5, window_bounds = array<i64: 1, 256>}, {pipeline_mode = #tpu.pipeline_mode<synchronous>, transform_indices = @transform_6, window_bounds = array<i64: 256, 128>}, {pipeline_mode = #tpu.pipeline_mode<synchronous>, transform_indices = @transform_7, window_bounds = array<i64: 1, 128>}, {transform_indices = @transform_8, window_bounds = array<i64: 8, 128>}, {transform_indices = @transform_9, window_bounds = array<i64: 8, 128>}]} {
    %c0 = arith.constant 0 : index
    %c0_0 = arith.constant 0 : index
    %0 = vector.load %arg3[%c0, %c0_0] : memref<128x256xbf16, #tpu.memory_space<vmem>>, vector<128x256xbf16>
    %c0_1 = arith.constant 0 : index
    %c0_2 = arith.constant 0 : index
    %1 = vector.load %arg4[%c0_1, %c0_2] : memref<1x256xf32, #tpu.memory_space<vmem>>, vector<1x256xf32>
    %c0_3 = arith.constant 0 : index
    %c0_4 = arith.constant 0 : index
    %2 = vector.load %arg5[%c0_3, %c0_4] : memref<256x256xbf16, #tpu.memory_space<vmem>>, vector<256x256xbf16>
    %c0_5 = arith.constant 0 : index
    %c0_6 = arith.constant 0 : index
    %3 = vector.load %arg6[%c0_5, %c0_6] : memref<1x256xf32, #tpu.memory_space<vmem>>, vector<1x256xf32>
    %c0_7 = arith.constant 0 : index
    %c0_8 = arith.constant 0 : index
    %4 = vector.load %arg7[%c0_7, %c0_8] : memref<256x128xbf16, #tpu.memory_space<vmem>>, vector<256x128xbf16>
    %c0_9 = arith.constant 0 : index
    %c0_10 = arith.constant 0 : index
    %5 = vector.load %arg8[%c0_9, %c0_10] : memref<1x128xf32, #tpu.memory_space<vmem>>, vector<1x128xf32>
    %c0_11 = arith.constant 0 : index
    %c0_12 = arith.constant 0 : index
    %6 = vector.load %arg1[%c0_11, %c0_12] : memref<8x128xbf16, #tpu.memory_space<vmem>>, vector<8x128xbf16>
    %cst = arith.constant dense<0.000000e+00> : vector<8x256xf32>
    %7 = tpu.matmul %6, %0, %cst {dimension_numbers = #tpu.dot_dimension_numbers<[1], [0], [0], [1], [0, 0, 1, 1], [], []>} : vector<8x128xbf16>, vector<128x256xbf16>, vector<8x256xf32> -> vector<8x256xf32>
    %8 = vector.broadcast %1 : vector<1x256xf32> to vector<8x256xf32>
    %9 = arith.addf %7, %8 : vector<8x256xf32>
    %cst_13 = arith.constant 0.000000e+00 : f32
    %10 = vector.broadcast %cst_13 : f32 to vector<8x256xf32>
    %11 = arith.maximumf %9, %10 : vector<8x256xf32>
    %12 = arith.truncf %11 : vector<8x256xf32> to vector<8x256xbf16>
    %cst_14 = arith.constant dense<0.000000e+00> : vector<8x256xf32>
    %13 = tpu.matmul %12, %2, %cst_14 {dimension_numbers = #tpu.dot_dimension_numbers<[1], [0], [0], [1], [0, 0, 1, 1], [], []>} : vector<8x256xbf16>, vector<256x256xbf16>, vector<8x256xf32> -> vector<8x256xf32>
    %14 = vector.broadcast %3 : vector<1x256xf32> to vector<8x256xf32>
    %15 = arith.addf %13, %14 : vector<8x256xf32>
    %cst_15 = arith.constant 0.000000e+00 : f32
    %16 = vector.broadcast %cst_15 : f32 to vector<8x256xf32>
    %17 = arith.maximumf %15, %16 : vector<8x256xf32>
    %18 = arith.truncf %17 : vector<8x256xf32> to vector<8x256xbf16>
    %cst_16 = arith.constant dense<0.000000e+00> : vector<8x128xf32>
    %19 = tpu.matmul %18, %4, %cst_16 {dimension_numbers = #tpu.dot_dimension_numbers<[1], [0], [0], [1], [0, 0, 1, 1], [], []>} : vector<8x256xbf16>, vector<256x128xbf16>, vector<8x128xf32> -> vector<8x128xf32>
    %20 = vector.broadcast %5 : vector<1x128xf32> to vector<8x128xf32>
    %21 = arith.addf %19, %20 : vector<8x128xf32>
    %c0_17 = arith.constant 0 : index
    %c0_18 = arith.constant 0 : index
    %22 = vector.load %arg9[%c0_17, %c0_18] : memref<8x128xf32, #tpu.memory_space<vmem>>, vector<8x128xf32>
    tpu.vector_store %arg9[%c0_17, %c0_18], %21 {strides = array<i32>} : memref<8x128xf32, #tpu.memory_space<vmem>>, vector<8x128xf32>,
    %c0_19 = arith.constant 0 : index
    %c0_20 = arith.constant 0 : index
    %23 = vector.load %arg2[%c0_19, %c0_20] : memref<8x128xbf16, #tpu.memory_space<vmem>>, vector<8x128xbf16>
    %cst_21 = arith.constant dense<0.000000e+00> : vector<8x256xf32>
    %24 = tpu.matmul %23, %0, %cst_21 {dimension_numbers = #tpu.dot_dimension_numbers<[1], [0], [0], [1], [0, 0, 1, 1], [], []>} : vector<8x128xbf16>, vector<128x256xbf16>, vector<8x256xf32> -> vector<8x256xf32>
    %25 = vector.broadcast %1 : vector<1x256xf32> to vector<8x256xf32>
    %26 = arith.addf %24, %25 : vector<8x256xf32>
    %cst_22 = arith.constant 0.000000e+00 : f32
    %27 = vector.broadcast %cst_22 : f32 to vector<8x256xf32>
    %28 = arith.maximumf %26, %27 : vector<8x256xf32>
    %29 = arith.truncf %28 : vector<8x256xf32> to vector<8x256xbf16>
    %cst_23 = arith.constant dense<0.000000e+00> : vector<8x256xf32>
    %30 = tpu.matmul %29, %2, %cst_23 {dimension_numbers = #tpu.dot_dimension_numbers<[1], [0], [0], [1], [0, 0, 1, 1], [], []>} : vector<8x256xbf16>, vector<256x256xbf16>, vector<8x256xf32> -> vector<8x256xf32>
    %31 = vector.broadcast %3 : vector<1x256xf32> to vector<8x256xf32>
    %32 = arith.addf %30, %31 : vector<8x256xf32>
    %cst_24 = arith.constant 0.000000e+00 : f32
    %33 = vector.broadcast %cst_24 : f32 to vector<8x256xf32>
    %34 = arith.maximumf %32, %33 : vector<8x256xf32>
    %35 = arith.truncf %34 : vector<8x256xf32> to vector<8x256xbf16>
    %cst_25 = arith.constant dense<0.000000e+00> : vector<8x128xf32>
    %36 = tpu.matmul %35, %4, %cst_25 {dimension_numbers = #tpu.dot_dimension_numbers<[1], [0], [0], [1], [0, 0, 1, 1], [], []>} : vector<8x256xbf16>, vector<256x128xbf16>, vector<8x128xf32> -> vector<8x128xf32>
    %37 = vector.broadcast %5 : vector<1x128xf32> to vector<8x128xf32>
    %38 = arith.addf %36, %37 : vector<8x128xf32>
    %c0_26 = arith.constant 0 : index
    %c0_27 = arith.constant 0 : index
    %39 = vector.load %arg10[%c0_26, %c0_27] : memref<8x128xf32, #tpu.memory_space<vmem>>, vector<8x128xf32>
    tpu.vector_store %arg10[%c0_26, %c0_27], %38 {strides = array<i32>} : memref<8x128xf32, #tpu.memory_space<vmem>>, vector<8x128xf32>,
    return
  }
  func.func @transform_0(%arg0: i32) -> (i32, i32) {
    %c0_i32 = arith.constant 0 : i32
    %c0_i32_0 = arith.constant 0 : i32
    return %arg0, %c0_i32 : i32, i32
  }
  func.func @transform_1(%arg0: i32) -> (i32, i32) {
    %c0_i32 = arith.constant 0 : i32
    %c0_i32_0 = arith.constant 0 : i32
    return %arg0, %c0_i32 : i32, i32
  }
  func.func @transform_2(%arg0: i32) -> (i32, i32) {
    %c0_i32 = arith.constant 0 : i32
    %c0_i32_0 = arith.constant 0 : i32
    %c0_i32_1 = arith.constant 0 : i32
    return %c0_i32, %c0_i32_0 : i32, i32
  }
  func.func @transform_3(%arg0: i32) -> (i32, i32) {
    %c0_i32 = arith.constant 0 : i32
    %c0_i32_0 = arith.constant 0 : i32
    %c0_i32_1 = arith.constant 0 : i32
    return %c0_i32, %c0_i32_0 : i32, i32
  }
  func.func @transform_4(%arg0: i32) -> (i32, i32) {
    %c0_i32 = arith.constant 0 : i32
    %c0_i32_0 = arith.constant 0 : i32
    %c0_i32_1 = arith.constant 0 : i32
    return %c0_i32, %c0_i32_0 : i32, i32
  }
  func.func @transform_5(%arg0: i32) -> (i32, i32) {
    %c0_i32 = arith.constant 0 : i32
    %c0_i32_0 = arith.constant 0 : i32
    %c0_i32_1 = arith.constant 0 : i32
    return %c0_i32, %c0_i32_0 : i32, i32
  }
  func.func @transform_6(%arg0: i32) -> (i32, i32) {
    %c0_i32 = arith.constant 0 : i32
    %c0_i32_0 = arith.constant 0 : i32
    %c0_i32_1 = arith.constant 0 : i32
    return %c0_i32, %c0_i32_0 : i32, i32
  }
  func.func @transform_7(%arg0: i32) -> (i32, i32) {
    %c0_i32 = arith.constant 0 : i32
    %c0_i32_0 = arith.constant 0 : i32
    %c0_i32_1 = arith.constant 0 : i32
    return %c0_i32, %c0_i32_0 : i32, i32
  }
  func.func @transform_8(%arg0: i32) -> (i32, i32) {
    %c0_i32 = arith.constant 0 : i32
    %c0_i32_0 = arith.constant 0 : i32
    return %arg0, %c0_i32 : i32, i32
  }
  func.func @transform_9(%arg0: i32) -> (i32, i32) {
    %c0_i32 = arith.constant 0 : i32
    %c0_i32_0 = arith.constant 0 : i32
    return %arg0, %c0_i32 : i32, i32
  }
}

</mosaic_0001>

<llo_original>
// kernel: siamese_forward.1
$region0: #{siamese_forward.1}
  #allocation0 [shape = 'u32[]', space=smem, size = 0x4, offset = 0x4, fixed_abs, tag = 'smem constant byte address 0x4 - core index']
  #allocation1 [shape = 'u32[144,128]{1,0:T(1,128)}', space=vmem, size = 0x12000, scoped, tag = 'internal scratch']
  %s0 = inlined_call_operand.vmem [shape: bf16[8,128], index: 0, kind: input, shape index: {}]
  %s1 = inlined_call_operand.vmem [shape: bf16[8,128], index: 1, kind: input, shape index: {}]
  %s2 = inlined_call_operand.hbm [shape: bf16[128,256], index: 2, kind: input, shape index: {}]
  %s3 = inlined_call_operand.vmem [shape: f32[1,256], index: 3, kind: input, shape index: {}]
  %s4 = inlined_call_operand.hbm [shape: bf16[256,256], index: 4, kind: input, shape index: {}]
  %s5 = inlined_call_operand.vmem [shape: f32[1,256], index: 5, kind: input, shape index: {}]
  %s6 = inlined_call_operand.hbm [shape: bf16[256,128], index: 6, kind: input, shape index: {}]
  %s7 = inlined_call_operand.vmem [shape: f32[1,128], index: 7, kind: input, shape index: {}]
  %s8 = inlined_call_operand.vmem [shape: f32[8,128], index: 8, kind: output, shape index: {0}]
  %s9 = inlined_call_operand.vmem [shape: f32[8,128], index: 9, kind: output, shape index: {1}]
  %10 = xla_tuple %s8, %s9
  %s11 = sld [smem:[#allocation0]]
  $region62: #{siamese_forward.1} parent=0
    _
  %s13 = ssub.s32 1, %s11
  %s14 = scalar_select 0, %s13, %s11
  $region1: #{siamese_forward.1} parent=0
    #allocation2 [shape = 'u8[65536]{0}', space=vmem, size = 0x10000, scoped, tag = 'input window, operand 2, single buffered']
    #allocation3 [shape = 's32[1]{0}', space=sflag, size = 0x4, scoped, tag = 'scoped memory for siamese_forward.1']
    #allocation4 [shape = 'u8[131072]{0}', space=vmem, size = 0x20000, scoped, tag = 'input window, operand 4, single buffered']
    #allocation5 [shape = 's32[1]{0}', space=sflag, size = 0x4, scoped, tag = 'scoped memory for siamese_forward.1']
    #allocation6 [shape = 'u8[65536]{0}', space=vmem, size = 0x10000, scoped, tag = 'input window, operand 6, single buffered']
    %15 = vsyncpa [#allocation3], 0
    %16 = vsyncpa [#allocation5], 0
    // Predicated region
    $region2: #{siamese_forward.1} parent=1 // pred_check
      _
    $region3: #{siamese_forward.1} parent=1 // pred_check_branch
      %18 = sbr.rel (0) target = $region5
    $region4: #{siamese_forward.1} parent=1 // pred_region
      _
    $region5: #{siamese_forward.1} parent=1 // pred_fallthru
      _
    // Predicated region
    $region6: #{siamese_forward.1} parent=1 // pred_check
      _
    $region7: #{siamese_forward.1} parent=1 // pred_check_branch
      %20 = sbr.rel (0) target = $region9
    $region8: #{siamese_forward.1} parent=1 // pred_region
      _
    $region9: #{siamese_forward.1} parent=1 // pred_fallthru
      _
    // Predicated region
    $region10: #{siamese_forward.1} parent=1 // pred_check
      _
    $region11: #{siamese_forward.1} parent=1 // pred_check_branch
      %22 = sbr.rel (0) target = $region13
    $region12: #{siamese_forward.1} parent=1 // pred_region
      %s24 = ssub.s32 2048, 2048
      %25 = vsyncadd [#allocation3], %s24
      %s26 = sshll.u32 [#allocation2], 4
      %s27 = int_to_ptr.vmem [resolvable:$true] %s26
      %32 = dma.hbm_to_vmem [thread:$0]  %s2, 2048, %s27, [#allocation3], 128, 128, 8
    $region13: #{siamese_forward.1} parent=1 // pred_fallthru
      _
    // Predicated region
    $region14: #{siamese_forward.1} parent=1 // pred_check
      _
    $region15: #{siamese_forward.1} parent=1 // pred_check_branch
      %34 = sbr.rel (0) target = $region17
    $region16: #{siamese_forward.1} parent=1 // pred_region
      _
    $region17: #{siamese_forward.1} parent=1 // pred_fallthru
      _
    // Predicated region
    $region18: #{siamese_forward.1} parent=1 // pred_check
      _
    $region19: #{siamese_forward.1} parent=1 // pred_check_branch
      %36 = sbr.rel (0) target = $region21
    $region20: #{siamese_forward.1} parent=1 // pred_region
      %s38 = ssub.s32 4096, 4096
      %39 = vsyncadd [#allocation5], %s38
      %s40 = sshll.u32 [#allocation4], 4
      %s41 = int_to_ptr.vmem [resolvable:$true] %s40
      %46 = dma.hbm_to_vmem [thread:$0]  %s4, 4096, %s41, [#allocation5], 128, 128, 8
    $region21: #{siamese_forward.1} parent=1 // pred_fallthru
      _
    // Predicated region
    $region22: #{siamese_forward.1} parent=1 // pred_check
      _
    $region23: #{siamese_forward.1} parent=1 // pred_check_branch
      %48 = sbr.rel (0) target = $region25
    $region24: #{siamese_forward.1} parent=1 // pred_region
      _
    $region25: #{siamese_forward.1} parent=1 // pred_fallthru
      _
    // Predicated region
    $region26: #{siamese_forward.1} parent=1 // pred_check
      _
    $region27: #{siamese_forward.1} parent=1 // pred_check_branch
      %50 = sbr.rel (0) target = $region29
    $region28: #{siamese_forward.1} parent=1 // pred_region
      %s52 = ssub.s32 2048, 2048
      %53 = vsyncadd [#allocation5], %s52
      %s54 = sshll.u32 [#allocation6], 4
      %s55 = int_to_ptr.vmem [resolvable:$true] %s54
      %60 = dma.hbm_to_vmem [thread:$0]  %s6, 2048, %s55, [#allocation5], 64, 64, 4
    $region29: #{siamese_forward.1} parent=1 // pred_fallthru
      _
    // Predicated region
    $region30: #{siamese_forward.1} parent=1 // pred_check
      _
    $region31: #{siamese_forward.1} parent=1 // pred_check_branch
      %62 = sbr.rel (0) target = $region33
    $region32: #{siamese_forward.1} parent=1 // pred_region
      _
    $region33: #{siamese_forward.1} parent=1 // pred_fallthru
      _
    // Predicated region
    $region34: #{siamese_forward.1} parent=1 // pred_check
      _
    $region35: #{siamese_forward.1} parent=1 // pred_check_branch
      %64 = sbr.rel (0) target = $region37
    $region36: #{siamese_forward.1} parent=1 // pred_region
      %65 = dma.done [#allocation3], 2048
    $region37: #{siamese_forward.1} parent=1 // pred_fallthru
      _
    // Predicated region
    $region38: #{siamese_forward.1} parent=1 // pred_check
      _
    $region39: #{siamese_forward.1} parent=1 // pred_check_branch
      %67 = sbr.rel (0) target = $region41
    $region40: #{siamese_forward.1} parent=1 // pred_region
      %68 = dma.done [#allocation5], 4096
    $region41: #{siamese_forward.1} parent=1 // pred_fallthru
      _
    // Predicated region
    $region42: #{siamese_forward.1} parent=1 // pred_check
      _
    $region43: #{siamese_forward.1} parent=1 // pred_check_branch
      %70 = sbr.rel (0) target = $region45
    $region44: #{siamese_forward.1} parent=1 // pred_region
      %71 = dma.done [#allocation5], 2048
    $region45: #{siamese_forward.1} parent=1 // pred_fallthru
      _
    %v73 = vld [vmem:[#allocation2] sm:$0xff]
    %v74 = vld [vmem:[#allocation2 + $0x8] sm:$0xff]
    %v75 = vld [vmem:[#allocation2 + $0x10] sm:$0xff]
    %v76 = vld [vmem:[#allocation2 + $0x18] sm:$0xff]
    %v77 = vld [vmem:[#allocation2 + $0x20] sm:$0xff]
    %v78 = vld [vmem:[#allocation2 + $0x28] sm:$0xff]
    %v79 = vld [vmem:[#allocation2 + $0x30] sm:$0xff]
    %v80 = vld [vmem:[#allocation2 + $0x38] sm:$0xff]
    %v81 = vld [vmem:[#allocation2 + $0x40] sm:$0xff]
    %v82 = vld [vmem:[#allocation2 + $0x48] sm:$0xff]
    %v83 = vld [vmem:[#allocation2 + $0x50] sm:$0xff]
    %v84 = vld [vmem:[#allocation2 + $0x58] sm:$0xff]
    %v85 = vld [vmem:[#allocation2 + $0x60] sm:$0xff]
    %v86 = vld [vmem:[#allocation2 + $0x68] sm:$0xff]
    %v87 = vld [vmem:[#allocation2 + $0x70] sm:$0xff]
    %v88 = vld [vmem:[#allocation2 + $0x78] sm:$0xff]
    %v89 = vld [vmem:[%s3] sm:$0x3]
    %v90 = vld [vmem:[#allocation4] sm:$0xff]
    %v91 = vld [vmem:[#allocation4 + $0x8] sm:$0xff]
    %v92 = vld [vmem:[#allocation4 + $0x10] sm:$0xff]
    %v93 = vld [vmem:[#allocation4 + $0x18] sm:$0xff]
    %v94 = vld [vmem:[#allocation4 + $0x20] sm:$0xff]
    %v95 = vld [vmem:[#allocation4 + $0x28] sm:$0xff]
    %v96 = vld [vmem:[#allocation4 + $0x30] sm:$0xff]
    %v97 = vld [vmem:[#allocation4 + $0x38] sm:$0xff]
    %v98 = vld [vmem:[#allocation4 + $0x40] sm:$0xff]
    %v99 = vld [vmem:[#allocation4 + $0x48] sm:$0xff]
    %v100 = vld [vmem:[#allocation4 + $0x50] sm:$0xff]
    %v101 = vld [vmem:[#allocation4 + $0x58] sm:$0xff]
    %v102 = vld [vmem:[#allocation4 + $0x60] sm:$0xff]
    %v103 = vld [vmem:[#allocation4 + $0x68] sm:$0xff]
    %v104 = vld [vmem:[#allocation4 + $0x70] sm:$0xff]
    %v105 = vld [vmem:[#allocation4 + $0x78] sm:$0xff]
    %v106 = vld [vmem:[#allocation4 + $0x80] sm:$0xff]
    %v107 = vld [vmem:[#allocation4 + $0x88] sm:$0xff]
    %v108 = vld [vmem:[#allocation4 + $0x90] sm:$0xff]
    %v109 = vld [vmem:[#allocation4 + $0x98] sm:$0xff]
    %v110 = vld [vmem:[#allocation4 + $0xa0] sm:$0xff]
    %v111 = vld [vmem:[#allocation4 + $0xa8] sm:$0xff]
    %v112 = vld [vmem:[#allocation4 + $0xb0] sm:$0xff]
    %v113 = vld [vmem:[#allocation4 + $0xb8] sm:$0xff]
    %v114 = vld [vmem:[#allocation4 + $0xc0] sm:$0xff]
    %v115 = vld [vmem:[#allocation4 + $0xc8] sm:$0xff]
    %v116 = vld [vmem:[#allocation4 + $0xd0] sm:$0xff]
    %v117 = vld [vmem:[#allocation4 + $0xd8] sm:$0xff]
    %v118 = vld [vmem:[#allocation4 + $0xe0] sm:$0xff]
    %v119 = vld [vmem:[#allocation4 + $0xe8] sm:$0xff]
    %v120 = vld [vmem:[#allocation4 + $0xf0] sm:$0xff]
    %v121 = vld [vmem:[#allocation4 + $0xf8] sm:$0xff]
    %v122 = vld [vmem:[%s5] sm:$0x3]
    %v123 = vld [vmem:[#allocation6] sm:$0xf]
    %v124 = vld [vmem:[#allocation6 + $0x4] sm:$0xf]
    %v125 = vld [vmem:[#allocation6 + $0x8] sm:$0xf]
    %v126 = vld [vmem:[#allocation6 + $0xc] sm:$0xf]
    %v127 = vld [vmem:[#allocation6 + $0x10] sm:$0xf]
    %v128 = vld [vmem:[#allocation6 + $0x14] sm:$0xf]
    %v129 = vld [vmem:[#allocation6 + $0x18] sm:$0xf]
    %v130 = vld [vmem:[#allocation6 + $0x1c] sm:$0xf]
    %v131 = vld [vmem:[#allocation6 + $0x20] sm:$0xf]
    %v132 = vld [vmem:[#allocation6 + $0x24] sm:$0xf]
    %v133 = vld [vmem:[#allocation6 + $0x28] sm:$0xf]
    %v134 = vld [vmem:[#allocation6 + $0x2c] sm:$0xf]
    %v135 = vld [vmem:[#allocation6 + $0x30] sm:$0xf]
    %v136 = vld [vmem:[#allocation6 + $0x34] sm:$0xf]
    %v137 = vld [vmem:[#allocation6 + $0x38] sm:$0xf]
    %v138 = vld [vmem:[#allocation6 + $0x3c] sm:$0xf]
    %v139 = vld [vmem:[#allocation6 + $0x40] sm:$0xf]
    %v140 = vld [vmem:[#allocation6 + $0x44] sm:$0xf]
    %v141 = vld [vmem:[#allocation6 + $0x48] sm:$0xf]
    %v142 = vld [vmem:[#allocation6 + $0x4c] sm:$0xf]
    %v143 = vld [vmem:[#allocation6 + $0x50] sm:$0xf]
    %v144 = vld [vmem:[#allocation6 + $0x54] sm:$0xf]
    %v145 = vld [vmem:[#allocation6 + $0x58] sm:$0xf]
    %v146 = vld [vmem:[#allocation6 + $0x5c] sm:$0xf]
    %v147 = vld [vmem:[#allocation6 + $0x60] sm:$0xf]
    %v148 = vld [vmem:[#allocation6 + $0x64] sm:$0xf]
    %v149 = vld [vmem:[#allocation6 + $0x68] sm:$0xf]
    %v150 = vld [vmem:[#allocation6 + $0x6c] sm:$0xf]
    %v151 = vld [vmem:[#allocation6 + $0x70] sm:$0xf]
    %v152 = vld [vmem:[#allocation6 + $0x74] sm:$0xf]
    %v153 = vld [vmem:[#allocation6 + $0x78] sm:$0xf]
    %v154 = vld [vmem:[#allocation6 + $0x7c] sm:$0xf]
    %v155 = vld [vmem:[%s7] sm:$0x1]
    %v156 = vld [vmem:[%s0] sm:$0xf]
    %v158 = vlaneseq
    %v159 = vshrl.u32 %v158, 7
    %v160 = vsub.s32 0, %v159
    %v161 = vrot.slane %v89, %v160
    %v162 = vlaneseq
    %v163 = vshrl.u32 %v162, 7
    %v164 = vsub.s32 1, %v163
    %v165 = vrot.slane %v89, %v164
    %v184 = vunpack.c.l.b16 %v73
    %v185 = vunpack.c.h.b16 %v73
    %v186 = vunpack.c.l.b16 %v74
    %v187 = vunpack.c.h.b16 %v74
    %v188 = vunpack.c.l.b16 %v75
    %v189 = vunpack.c.h.b16 %v75
    %v190 = vunpack.c.l.b16 %v76
    %v191 = vunpack.c.h.b16 %v76
    %v192 = vunpack.c.l.b16 %v77
    %v193 = vunpack.c.h.b16 %v77
    %v194 = vunpack.c.l.b16 %v78
    %v195 = vunpack.c.h.b16 %v78
    %v196 = vunpack.c.l.b16 %v79
    %v197 = vunpack.c.h.b16 %v79
    %v198 = vunpack.c.l.b16 %v80
    %v199 = vunpack.c.h.b16 %v80
    %v200 = vunpack.c.l.b16 %v81
    %v201 = vunpack.c.h.b16 %v81
    %v202 = vunpack.c.l.b16 %v82
    %v203 = vunpack.c.h.b16 %v82
    %v204 = vunpack.c.l.b16 %v83
    %v205 = vunpack.c.h.b16 %v83
    %v206 = vunpack.c.l.b16 %v84
    %v207 = vunpack.c.h.b16 %v84
    %v208 = vunpack.c.l.b16 %v85
    %v209 = vunpack.c.h.b16 %v85
    %v210 = vunpack.c.l.b16 %v86
    %v211 = vunpack.c.h.b16 %v86
    %v212 = vunpack.c.l.b16 %v87
    %v213 = vunpack.c.h.b16 %v87
    %v214 = vunpack.c.l.b16 %v88
    %v215 = vunpack.c.h.b16 %v88
    %v216 = vpack.c.b16 %v186, %v184
    %v217 = vpack.c.b16 %v187, %v185
    %v218 = vpack.c.b16 %v190, %v188
    %v219 = vpack.c.b16 %v191, %v189
    %v220 = vpack.c.b16 %v194, %v192
    %v221 = vpack.c.b16 %v195, %v193
    %v222 = vpack.c.b16 %v198, %v196
    %v223 = vpack.c.b16 %v199, %v197
    %v224 = vpack.c.b16 %v202, %v200
    %v225 = vpack.c.b16 %v203, %v201
    %v226 = vpack.c.b16 %v206, %v204
    %v227 = vpack.c.b16 %v207, %v205
    %v228 = vpack.c.b16 %v210, %v208
    %v229 = vpack.c.b16 %v211, %v209
    %v230 = vpack.c.b16 %v214, %v212
    %v231 = vpack.c.b16 %v215, %v213
    %248 = vmatprep.subr.bf16.mxu0 %v217
    %249 = vmatpush1.bf16.msra.mxu0 %v216
    %250 = vmatprep.subr.bf16.mxu0 %v219
    %251 = vmatpush1.bf16.msra.mxu0 %v218
    %252 = vmatprep.subr.bf16.mxu0 %v221
    %253 = vmatpush1.bf16.msra.mxu0 %v220
    %254 = vmatprep.subr.bf16.mxu0 %v223
    %255 = vmatpush1.bf16.msra.mxu0 %v222
    %256 = vmatprep.subr.bf16.mxu0 %v225
    %257 = vmatpush1.bf16.msra.mxu0 %v224
    %258 = vmatprep.subr.bf16.mxu0 %v227
    %259 = vmatpush1.bf16.msra.mxu0 %v226
    %260 = vmatprep.subr.bf16.mxu0 %v229
    %261 = vmatpush1.bf16.msra.mxu0 %v228
    %262 = vmatprep.subr.bf16.mxu0 %v231
    %263 = vmatpush1.bf16.msra.mxu0 %v230
    %264 = vmatprep.subr.bf16.mxu0 0
    %265 = vmatpush1.bf16.msra.mxu0 0
    %266 = vmatprep.subr.bf16.mxu0 0
    %267 = vmatpush1.bf16.msra.mxu0 0
    %268 = vmatprep.subr.bf16.mxu0 0
    %269 = vmatpush1.bf16.msra.mxu0 0
    %270 = vmatprep.subr.bf16.mxu0 0
    %271 = vmatpush1.bf16.msra.mxu0 0
    %272 = vmatprep.subr.bf16.mxu0 0
    %273 = vmatpush1.bf16.msra.mxu0 0
    %274 = vmatprep.subr.bf16.mxu0 0
    %275 = vmatpush1.bf16.msra.mxu0 0
    %276 = vmatprep.subr.bf16.mxu0 0
    %277 = vmatpush1.bf16.msra.mxu0 0
    %278 = vmatprep.subr.bf16.mxu0 0
    %279 = vmatpush1.bf16.msra.mxu0 0
    %280 = vmatprep.mubr.bf16.mxu0 0
    %281 = vmatmul.mubr.bf16.gmra.mrb[0].mxu0 %v156
    %v282 = vpop.f32.mrb[0].mxu0
    %v283 = vadd.f32 %v161, %v282
    %v284 = vpop.f32.mrb[0].mxu0
    %v285 = vadd.f32 %v165, %v284
    %v286 = vpop.f32.mrb[0].mxu0
    %v287 = vpop.f32.mrb[0].mxu0
    %288 = vdwg.mxu0
    %v289 = vmax.f32 %v283, 0.0
    %v290 = vmax.f32 %v285, 0.0
    %v291 = vpack.c.bf16 %v289, %v289
    %v292 = vpack.c.bf16 %v290, %v290
    %v294 = vlaneseq
    %v295 = vshrl.u32 %v294, 7
    %v296 = vsub.s32 0, %v295
    %v297 = vrot.slane %v122, %v296
    %v298 = vlaneseq
    %v299 = vshrl.u32 %v298, 7
    %v300 = vsub.s32 1, %v299
    %v301 = vrot.slane %v122, %v300
    %v336 = vunpack.c.l.b16 %v90
    %v337 = vunpack.c.h.b16 %v90
    %v338 = vunpack.c.l.b16 %v91
    %v339 = vunpack.c.h.b16 %v91
    %v340 = vunpack.c.l.b16 %v92
    %v341 = vunpack.c.h.b16 %v92
    %v342 = vunpack.c.l.b16 %v93
    %v343 = vunpack.c.h.b16 %v93
    %v344 = vunpack.c.l.b16 %v94
    %v345 = vunpack.c.h.b16 %v94
    %v346 = vunpack.c.l.b16 %v95
    %v347 = vunpack.c.h.b16 %v95
    %v348 = vunpack.c.l.b16 %v96
    %v349 = vunpack.c.h.b16 %v96
    %v350 = vunpack.c.l.b16 %v97
    %v351 = vunpack.c.h.b16 %v97
    %v352 = vunpack.c.l.b16 %v98
    %v353 = vunpack.c.h.b16 %v98
    %v354 = vunpack.c.l.b16 %v99
    %v355 = vunpack.c.h.b16 %v99
    %v356 = vunpack.c.l.b16 %v100
    %v357 = vunpack.c.h.b16 %v100
    %v358 = vunpack.c.l.b16 %v101
    %v359 = vunpack.c.h.b16 %v101
    %v360 = vunpack.c.l.b16 %v102
    %v361 = vunpack.c.h.b16 %v102
    %v362 = vunpack.c.l.b16 %v103
    %v363 = vunpack.c.h.b16 %v103
    %v364 = vunpack.c.l.b16 %v104
    %v365 = vunpack.c.h.b16 %v104
    %v366 = vunpack.c.l.b16 %v105
    %v367 = vunpack.c.h.b16 %v105
    %v368 = vunpack.c.l.b16 %v106
    %v369 = vunpack.c.h.b16 %v106
    %v370 = vunpack.c.l.b16 %v107
    %v371 = vunpack.c.h.b16 %v107
    %v372 = vunpack.c.l.b16 %v108
    %v373 = vunpack.c.h.b16 %v108
    %v374 = vunpack.c.l.b16 %v109
    %v375 = vunpack.c.h.b16 %v109
    %v376 = vunpack.c.l.b16 %v110
    %v377 = vunpack.c.h.b16 %v110
    %v378 = vunpack.c.l.b16 %v111
    %v379 = vunpack.c.h.b16 %v111
    %v380 = vunpack.c.l.b16 %v112
    %v381 = vunpack.c.h.b16 %v112
    %v382 = vunpack.c.l.b16 %v113
    %v383 = vunpack.c.h.b16 %v113
    %v384 = vunpack.c.l.b16 %v114
    %v385 = vunpack.c.h.b16 %v114
    %v386 = vunpack.c.l.b16 %v115
    %v387 = vunpack.c.h.b16 %v115
    %v388 = vunpack.c.l.b16 %v116
    %v389 = vunpack.c.h.b16 %v116
    %v390 = vunpack.c.l.b16 %v117
    %v391 = vunpack.c.h.b16 %v117
    %v392 = vunpack.c.l.b16 %v118
    %v393 = vunpack.c.h.b16 %v118
    %v394 = vunpack.c.l.b16 %v119
    %v395 = vunpack.c.h.b16 %v119
    %v396 = vunpack.c.l.b16 %v120
    %v397 = vunpack.c.h.b16 %v120
    %v398 = vunpack.c.l.b16 %v121
    %v399 = vunpack.c.h.b16 %v121
    %v400 = vpack.c.b16 %v338, %v336
    %v401 = vpack.c.b16 %v339, %v337
    %v402 = vpack.c.b16 %v342, %v340
    %v403 = vpack.c.b16 %v343, %v341
    %v404 = vpack.c.b16 %v346, %v344
    %v405 = vpack.c.b16 %v347, %v345
    %v406 = vpack.c.b16 %v350, %v348
    %v407 = vpack.c.b16 %v351, %v349
    %v408 = vpack.c.b16 %v354, %v352
    %v409 = vpack.c.b16 %v355, %v353
    %v410 = vpack.c.b16 %v358, %v356
    %v411 = vpack.c.b16 %v359, %v357
    %v412 = vpack.c.b16 %v362, %v360
    %v413 = vpack.c.b16 %v363, %v361
    %v414 = vpack.c.b16 %v366, %v364
    %v415 = vpack.c.b16 %v367, %v365
    %v416 = vpack.c.b16 %v370, %v368
    %v417 = vpack.c.b16 %v371, %v369
    %v418 = vpack.c.b16 %v374, %v372
    %v419 = vpack.c.b16 %v375, %v373
    %v420 = vpack.c.b16 %v378, %v376
    %v421 = vpack.c.b16 %v379, %v377
    %v422 = vpack.c.b16 %v382, %v380
    %v423 = vpack.c.b16 %v383, %v381
    %v424 = vpack.c.b16 %v386, %v384
    %v425 = vpack.c.b16 %v387, %v385
    %v426 = vpack.c.b16 %v390, %v388
    %v427 = vpack.c.b16 %v391, %v389
    %v428 = vpack.c.b16 %v394, %v392
    %v429 = vpack.c.b16 %v395, %v393
    %v430 = vpack.c.b16 %v398, %v396
    %v431 = vpack.c.b16 %v399, %v397
    %464 = vmatprep.subr.bf16.mxu0 %v401
    %465 = vmatpush1.bf16.msra.mxu0 %v400
    %466 = vmatprep.subr.bf16.mxu0 %v403
    %467 = vmatpush1.bf16.msra.mxu0 %v402
    %468 = vmatprep.subr.bf16.mxu0 %v405
    %469 = vmatpush1.bf16.msra.mxu0 %v404
    %470 = vmatprep.subr.bf16.mxu0 %v407
    %471 = vmatpush1.bf16.msra.mxu0 %v406
    %472 = vmatprep.subr.bf16.mxu0 %v409
    %473 = vmatpush1.bf16.msra.mxu0 %v408
    %474 = vmatprep.subr.bf16.mxu0 %v411
    %475 = vmatpush1.bf16.msra.mxu0 %v410
    %476 = vmatprep.subr.bf16.mxu0 %v413
    %477 = vmatpush1.bf16.msra.mxu0 %v412
    %478 = vmatprep.subr.bf16.mxu0 %v415
    %479 = vmatpush1.bf16.msra.mxu0 %v414
    %480 = vmatprep.subr.bf16.mxu0 %v417
    %481 = vmatpush1.bf16.msra.mxu0 %v416
    %482 = vmatprep.subr.bf16.mxu0 %v419
    %483 = vmatpush1.bf16.msra.mxu0 %v418
    %484 = vmatprep.subr.bf16.mxu0 %v421
    %485 = vmatpush1.bf16.msra.mxu0 %v420
    %486 = vmatprep.subr.bf16.mxu0 %v423
    %487 = vmatpush1.bf16.msra.mxu0 %v422
    %488 = vmatprep.subr.bf16.mxu0 %v425
    %489 = vmatpush1.bf16.msra.mxu0 %v424
    %490 = vmatprep.subr.bf16.mxu0 %v427
    %491 = vmatpush1.bf16.msra.mxu0 %v426
    %492 = vmatprep.subr.bf16.mxu0 %v429
    %493 = vmatpush1.bf16.msra.mxu0 %v428
    %494 = vmatprep.subr.bf16.mxu0 %v431
    %495 = vmatpush1.bf16.msra.mxu0 %v430
    %496 = vmatprep.mubr.bf16.mxu0 %v292
    %497 = vmatmul.mubr.bf16.gmra.mrb[0].mxu0 %v291
    %v498 = vpop.f32.mrb[0].mxu0
    %v499 = vadd.f32 %v297, %v498
    %v500 = vpop.f32.mrb[0].mxu0
    %v501 = vadd.f32 %v301, %v500
    %v502 = vpop.f32.mrb[0].mxu0
    %v503 = vpop.f32.mrb[0].mxu0
    %504 = vdwg.mxu0
    %v505 = vmax.f32 %v499, 0.0
    %v506 = vmax.f32 %v501, 0.0
    %v507 = vpack.c.bf16 %v505, %v505
    %v508 = vpack.c.bf16 %v506, %v506
    %v510 = vlaneseq
    %v511 = vshrl.u32 %v510, 7
    %v512 = vsub.s32 0, %v511
    %v513 = vrot.slane %v155, %v512
    %v547 = vunpack.c.l.b16 %v123
    %v548 = vunpack.c.l.b16 %v124
    %v549 = vunpack.c.l.b16 %v125
    %v550 = vunpack.c.l.b16 %v126
    %v551 = vunpack.c.l.b16 %v127
    %v552 = vunpack.c.l.b16 %v128
    %v553 = vunpack.c.l.b16 %v129
    %v554 = vunpack.c.l.b16 %v130
    %v555 = vunpack.c.l.b16 %v131
    %v556 = vunpack.c.l.b16 %v132
    %v557 = vunpack.c.l.b16 %v133
    %v558 = vunpack.c.l.b16 %v134
    %v559 = vunpack.c.l.b16 %v135
    %v560 = vunpack.c.l.b16 %v136
    %v561 = vunpack.c.l.b16 %v137
    %v562 = vunpack.c.l.b16 %v138
    %v563 = vunpack.c.l.b16 %v139
    %v564 = vunpack.c.l.b16 %v140
    %v565 = vunpack.c.l.b16 %v141
    %v566 = vunpack.c.l.b16 %v142
    %v567 = vunpack.c.l.b16 %v143
    %v568 = vunpack.c.l.b16 %v144
    %v569 = vunpack.c.l.b16 %v145
    %v570 = vunpack.c.l.b16 %v146
    %v571 = vunpack.c.l.b16 %v147
    %v572 = vunpack.c.l.b16 %v148
    %v573 = vunpack.c.l.b16 %v149
    %v574 = vunpack.c.l.b16 %v150
    %v575 = vunpack.c.l.b16 %v151
    %v576 = vunpack.c.l.b16 %v152
    %v577 = vunpack.c.l.b16 %v153
    %v578 = vunpack.c.l.b16 %v154
    %v579 = vpack.c.b16 %v548, %v547
    %v580 = vpack.c.b16 %v550, %v549
    %v581 = vpack.c.b16 %v552, %v551
    %v582 = vpack.c.b16 %v554, %v553
    %v583 = vpack.c.b16 %v556, %v555
    %v584 = vpack.c.b16 %v558, %v557
    %v585 = vpack.c.b16 %v560, %v559
    %v586 = vpack.c.b16 %v562, %v561
    %v587 = vpack.c.b16 %v564, %v563
    %v588 = vpack.c.b16 %v566, %v565
    %v589 = vpack.c.b16 %v568, %v567
    %v590 = vpack.c.b16 %v570, %v569
    %v591 = vpack.c.b16 %v572, %v571
    %v592 = vpack.c.b16 %v574, %v573
    %v593 = vpack.c.b16 %v576, %v575
    %v594 = vpack.c.b16 %v578, %v577
    %611 = vmatprep.subr.bf16.mxu0 0
    %612 = vmatpush1.bf16.msra.mxu0 %v579
    %613 = vmatprep.subr.bf16.mxu0 0
    %614 = vmatpush1.bf16.msra.mxu0 %v580
    %615 = vmatprep.subr.bf16.mxu0 0
    %616 = vmatpush1.bf16.msra.mxu0 %v581
    %617 = vmatprep.subr.bf16.mxu0 0
    %618 = vmatpush1.bf16.msra.mxu0 %v582
    %619 = vmatprep.subr.bf16.mxu0 0
    %620 = vmatpush1.bf16.msra.mxu0 %v583
    %621 = vmatprep.subr.bf16.mxu0 0
    %622 = vmatpush1.bf16.msra.mxu0 %v584
    %623 = vmatprep.subr.bf16.mxu0 0
    %624 = vmatpush1.bf16.msra.mxu0 %v585
    %625 = vmatprep.subr.bf16.mxu0 0
    %626 = vmatpush1.bf16.msra.mxu0 %v586
    %627 = vmatprep.subr.bf16.mxu0 0
    %628 = vmatpush1.bf16.msra.mxu0 %v587
    %629 = vmatprep.subr.bf16.mxu0 0
    %630 = vmatpush1.bf16.msra.mxu0 %v588
    %631 = vmatprep.subr.bf16.mxu0 0
    %632 = vmatpush1.bf16.msra.mxu0 %v589
    %633 = vmatprep.subr.bf16.mxu0 0
    %634 = vmatpush1.bf16.msra.mxu0 %v590
    %635 = vmatprep.subr.bf16.mxu0 0
    %636 = vmatpush1.bf16.msra.mxu0 %v591
    %637 = vmatprep.subr.bf16.mxu0 0
    %638 = vmatpush1.bf16.msra.mxu0 %v592
    %639 = vmatprep.subr.bf16.mxu0 0
    %640 = vmatpush1.bf16.msra.mxu0 %v593
    %641 = vmatprep.subr.bf16.mxu0 0
    %642 = vmatpush1.bf16.msra.mxu0 %v594
    %643 = vmatprep.mubr.bf16.mxu0 %v508
    %644 = vmatmul.mubr.bf16.gmra.mrb[0].mxu0 %v507
    %v645 = vpop.f32.mrb[0].mxu0
    %v646 = vadd.f32 %v513, %v645
    %v647 = vpop.f32.mrb[0].mxu0
    %v648 = vpop.f32.mrb[0].mxu0
    %v649 = vpop.f32.mrb[0].mxu0
    %650 = vdwg.mxu0
    %651 = vst [vmem:[%s8] sm:$0xff] %v646
    %v652 = vld [vmem:[%s1] sm:$0xf]
    %653 = vmatprep.subr.bf16.mxu0 %v217
    %654 = vmatpush1.bf16.msra.mxu0 %v216
    %655 = vmatprep.subr.bf16.mxu0 %v219
    %656 = vmatpush1.bf16.msra.mxu0 %v218
    %657 = vmatprep.subr.bf16.mxu0 %v221
    %658 = vmatpush1.bf16.msra.mxu0 %v220
    %659 = vmatprep.subr.bf16.mxu0 %v223
    %660 = vmatpush1.bf16.msra.mxu0 %v222
    %661 = vmatprep.subr.bf16.mxu0 %v225
    %662 = vmatpush1.bf16.msra.mxu0 %v224
    %663 = vmatprep.subr.bf16.mxu0 %v227
    %664 = vmatpush1.bf16.msra.mxu0 %v226
    %665 = vmatprep.subr.bf16.mxu0 %v229
    %666 = vmatpush1.bf16.msra.mxu0 %v228
    %667 = vmatprep.subr.bf16.mxu0 %v231
    %668 = vmatpush1.bf16.msra.mxu0 %v230
    %669 = vmatprep.subr.bf16.mxu0 0
    %670 = vmatpush1.bf16.msra.mxu0 0
    %671 = vmatprep.subr.bf16.mxu0 0
    %672 = vmatpush1.bf16.msra.mxu0 0
    %673 = vmatprep.subr.bf16.mxu0 0
    %674 = vmatpush1.bf16.msra.mxu0 0
    %675 = vmatprep.subr.bf16.mxu0 0
    %676 = vmatpush1.bf16.msra.mxu0 0
    %677 = vmatprep.subr.bf16.mxu0 0
    %678 = vmatpush1.bf16.msra.mxu0 0
    %679 = vmatprep.subr.bf16.mxu0 0
    %680 = vmatpush1.bf16.msra.mxu0 0
    %681 = vmatprep.subr.bf16.mxu0 0
    %682 = vmatpush1.bf16.msra.mxu0 0
    %683 = vmatprep.subr.bf16.mxu0 0
    %684 = vmatpush1.bf16.msra.mxu0 0
    %685 = vmatprep.mubr.bf16.mxu0 0
    %686 = vmatmul.mubr.bf16.gmra.mrb[0].mxu0 %v652
    %v687 = vpop.f32.mrb[0].mxu0
    %v688 = vadd.f32 %v161, %v687
    %v689 = vpop.f32.mrb[0].mxu0
    %v690 = vadd.f32 %v165, %v689
    %v691 = vpop.f32.mrb[0].mxu0
    %v692 = vpop.f32.mrb[0].mxu0
    %693 = vdwg.mxu0
    %v694 = vmax.f32 %v688, 0.0
    %v695 = vmax.f32 %v690, 0.0
    %v696 = vpack.c.bf16 %v694, %v694
    %v697 = vpack.c.bf16 %v695, %v695
    %698 = vmatprep.subr.bf16.mxu0 %v401
    %699 = vmatpush1.bf16.msra.mxu0 %v400
    %700 = vmatprep.subr.bf16.mxu0 %v403
    %701 = vmatpush1.bf16.msra.mxu0 %v402
    %702 = vmatprep.subr.bf16.mxu0 %v405
    %703 = vmatpush1.bf16.msra.mxu0 %v404
    %704 = vmatprep.subr.bf16.mxu0 %v407
    %705 = vmatpush1.bf16.msra.mxu0 %v406
    %706 = vmatprep.subr.bf16.mxu0 %v409
    %707 = vmatpush1.bf16.msra.mxu0 %v408
    %708 = vmatprep.subr.bf16.mxu0 %v411
    %709 = vmatpush1.bf16.msra.mxu0 %v410
    %710 = vmatprep.subr.bf16.mxu0 %v413
    %711 = vmatpush1.bf16.msra.mxu0 %v412
    %712 = vmatprep.subr.bf16.mxu0 %v415
    %713 = vmatpush1.bf16.msra.mxu0 %v414
    %714 = vmatprep.subr.bf16.mxu0 %v417
    %715 = vmatpush1.bf16.msra.mxu0 %v416
    %716 = vmatprep.subr.bf16.mxu0 %v419
    %717 = vmatpush1.bf16.msra.mxu0 %v418
    %718 = vmatprep.subr.bf16.mxu0 %v421
    %719 = vmatpush1.bf16.msra.mxu0 %v420
    %720 = vmatprep.subr.bf16.mxu0 %v423
    %721 = vmatpush1.bf16.msra.mxu0 %v422
    %722 = vmatprep.subr.bf16.mxu0 %v425
    %723 = vmatpush1.bf16.msra.mxu0 %v424
    %724 = vmatprep.subr.bf16.mxu0 %v427
    %725 = vmatpush1.bf16.msra.mxu0 %v426
    %726 = vmatprep.subr.bf16.mxu0 %v429
    %727 = vmatpush1.bf16.msra.mxu0 %v428
    %728 = vmatprep.subr.bf16.mxu0 %v431
    %729 = vmatpush1.bf16.msra.mxu0 %v430
    %730 = vmatprep.mubr.bf16.mxu0 %v697
    %731 = vmatmul.mubr.bf16.gmra.mrb[0].mxu0 %v696
    %v732 = vpop.f32.mrb[0].mxu0
    %v733 = vadd.f32 %v297, %v732
    %v734 = vpop.f32.mrb[0].mxu0
    %v735 = vadd.f32 %v301, %v734
    %v736 = vpop.f32.mrb[0].mxu0
    %v737 = vpop.f32.mrb[0].mxu0
    %738 = vdwg.mxu0
    %v739 = vmax.f32 %v733, 0.0
    %v740 = vmax.f32 %v735, 0.0
    %v741 = vpack.c.bf16 %v739, %v739
    %v742 = vpack.c.bf16 %v740, %v740
    %743 = vmatprep.subr.bf16.mxu0 0
    %744 = vmatpush1.bf16.msra.mxu0 %v579
    %745 = vmatprep.subr.bf16.mxu0 0
    %746 = vmatpush1.bf16.msra.mxu0 %v580
    %747 = vmatprep.subr.bf16.mxu0 0
    %748 = vmatpush1.bf16.msra.mxu0 %v581
    %749 = vmatprep.subr.bf16.mxu0 0
    %750 = vmatpush1.bf16.msra.mxu0 %v582
    %751 = vmatprep.subr.bf16.mxu0 0
    %752 = vmatpush1.bf16.msra.mxu0 %v583
    %753 = vmatprep.subr.bf16.mxu0 0
    %754 = vmatpush1.bf16.msra.mxu0 %v584
    %755 = vmatprep.subr.bf16.mxu0 0
    %756 = vmatpush1.bf16.msra.mxu0 %v585
    %757 = vmatprep.subr.bf16.mxu0 0
    %758 = vmatpush1.bf16.msra.mxu0 %v586
    %759 = vmatprep.subr.bf16.mxu0 0
    %760 = vmatpush1.bf16.msra.mxu0 %v587
    %761 = vmatprep.subr.bf16.mxu0 0
    %762 = vmatpush1.bf16.msra.mxu0 %v588
    %763 = vmatprep.subr.bf16.mxu0 0
    %764 = vmatpush1.bf16.msra.mxu0 %v589
    %765 = vmatprep.subr.bf16.mxu0 0
    %766 = vmatpush1.bf16.msra.mxu0 %v590
    %767 = vmatprep.subr.bf16.mxu0 0
    %768 = vmatpush1.bf16.msra.mxu0 %v591
    %769 = vmatprep.subr.bf16.mxu0 0
    %770 = vmatpush1.bf16.msra.mxu0 %v592
    %771 = vmatprep.subr.bf16.mxu0 0
    %772 = vmatpush1.bf16.msra.mxu0 %v593
    %773 = vmatprep.subr.bf16.mxu0 0
    %774 = vmatpush1.bf16.msra.mxu0 %v594
    %775 = vmatprep.mubr.bf16.mxu0 %v742
    %776 = vmatmul.mubr.bf16.gmra.mrb[0].mxu0 %v741
    %v777 = vpop.f32.mrb[0].mxu0
    %v778 = vadd.f32 %v513, %v777
    %v779 = vpop.f32.mrb[0].mxu0
    %v780 = vpop.f32.mrb[0].mxu0
    %v781 = vpop.f32.mrb[0].mxu0
    %782 = vdwg.mxu0
    %783 = vst [vmem:[%s9] sm:$0xff] %v778
    // Predicated region
    $region46: #{siamese_forward.1} parent=1 // pred_check
      _
    $region47: #{siamese_forward.1} parent=1 // pred_check_branch
      %785 = sbr.rel (0) target = $region49
    $region48: #{siamese_forward.1} parent=1 // pred_region
      _
    $region49: #{siamese_forward.1} parent=1 // pred_fallthru
      _
    // Predicated region
    $region50: #{siamese_forward.1} parent=1 // pred_check
      _
    $region51: #{siamese_forward.1} parent=1 // pred_check_branch
      %787 = sbr.rel (0) target = $region53
    $region52: #{siamese_forward.1} parent=1 // pred_region
      _
    $region53: #{siamese_forward.1} parent=1 // pred_fallthru
      _
    // Predicated region
    $region54: #{siamese_forward.1} parent=1 // pred_check
      _
    $region55: #{siamese_forward.1} parent=1 // pred_check_branch
      %789 = sbr.rel (0) target = $region57
    $region56: #{siamese_forward.1} parent=1 // pred_region
      _
    $region57: #{siamese_forward.1} parent=1 // pred_fallthru
      _
    // Predicated region
    $region58: #{siamese_forward.1} parent=1 // pred_check
      _
    $region59: #{siamese_forward.1} parent=1 // pred_check_branch
      %791 = sbr.rel (0) target = $region61
    $region60: #{siamese_forward.1} parent=1 // pred_region
      _
    $region61: #{siamese_forward.1} parent=1 // pred_fallthru
      _
    %792 = vsyncpa [#allocation3], 1
    %793 = vsyncpa [#allocation5], 1

</llo_original>
